<compile_context>
chip_gen: v6e
topology: v6e:2x2x1
jax: 0.10.0
libtpu: 0.0.40
codegen_flags: <defaults>
</compile_context>

<pallas_src>
import jax
import jax.numpy as jnp
from jax import lax
from jax.experimental import pallas as pl
from jax.experimental.pallas import tpu as pltpu

block_size = 32   # max sequence length (the module's causal buffer size)
n_embd = 64       # C
head_size = 16
dropout = 0.0     # Dropout(p=0.0) is the identity.
# TODO(synk): dropout with p > 0 would need pltpu.prng_* based masking; p == 0 here.


def _round_up(x, m):
    return ((x + m - 1) // m) * m


def _head_kernel(x_ref, w_ref, o_ref):
    # x_ref: (Bb, T, C) block of batch rows (f32).
    # w_ref: (C, 3H) fused [k | q*scale | v] weights, already bf16.
    # o_ref: (Bb, T*H) lane-dense output block (T*H is a multiple of 128 at T=8/16/32).
    Bb, T, C = x_ref.shape
    H = w_ref.shape[1] // 3

    x2 = x_ref[...].reshape(Bb * T, C).astype(jnp.bfloat16)            # (Bb*T, C)

    # Single fused k/q/v projection (one MXU GEMM), f32 accumulation.
    # The softmax scale C**-0.5 is pre-folded into the q columns of w.
    kqv = jnp.dot(x2, w_ref[...], preferred_element_type=jnp.float32)  # (Bb*T, 3H)
    kqv = kqv.reshape(Bb, T, 3 * H).astype(jnp.bfloat16)               # bf16 MXU inputs
    k = kqv[..., 0:H]                                                  # (Bb, T, H)
    q = kqv[..., H:2 * H]
    v = kqv[..., 2 * H:3 * H]

    # Attention scores: contract the head dim directly (no explicit k transpose).
    wei = jnp.einsum('bth,bsh->bts', q, k,
                     preferred_element_type=jnp.float32)               # (Bb, T, T) f32

    # Causal mask, computed once per grid step and broadcast over Bb.
    row = lax.broadcasted_iota(jnp.int32, (T, T), 0)
    col = lax.broadcasted_iota(jnp.int32, (T, T), 1)
    causal = (col <= row)[None, :, :]                                  # (1, T, T)
    wei = jnp.where(causal, wei, -1e30)   # finite mask: NaN-safe for zero-padded rows

    # Softmax along the last axis, in f32 (VPU/EUP work stays f32).
    m = jnp.max(wei, axis=-1, keepdims=True)
    p = jnp.exp(wei - m)
    denom = jnp.sum(p, axis=-1, keepdims=True)
    p = p * pl.reciprocal(denom, approx=True)

    # dropout(p=0.0) == identity.

    out = jnp.einsum('bts,bsh->bth', p.astype(jnp.bfloat16), v,
                     preferred_element_type=jnp.float32)               # (Bb, T, H) f32
    # Lane-dense store: collapse (T, H) -> T*H lanes so the store is unmasked.
    o_ref[...] = out.reshape(Bb, T * H).astype(o_ref.dtype)


def head_forward(x, wk, wq, wv, *, block_b=None):
    """x: (B, T, C) float32; wk/wq/wv: (C, head_size), so a projection is x @ W.

    Returns (B, T, head_size) in x.dtype.
    """
    B, T, C = x.shape
    H = wk.shape[1]
    scale = float(C) ** -0.5   # the module scales by C (= n_embd), not head_size

    # Fuse [k | q | v] into one (C, 3H) bf16 operand; fold the softmax scale into q.
    w = jnp.concatenate([wk, wq * scale, wv], axis=1).astype(jnp.bfloat16)

    if block_b is None:
        # ~2 MiB lane-padded x tile: block_b * T * 128 lanes * 4 B  ->  ~4096 / T rows.
        block_b = max(8, min(256, (4096 // max(T, 1)) // 8 * 8))
    # Multiple of 8 (sublane alignment of the lane-dense (block_b, T*H) output block)
    # and no larger than the 8-rounded batch.
    block_b = min(_round_up(max(block_b, 1), 8), _round_up(B, 8))

    num_blocks = pl.cdiv(B, block_b)
    Bp = num_blocks * block_b
    if Bp != B:
        # Padded rows are zeros; the finite -1e30 mask keeps them NaN-free and they
        # are dropped after the call.
        x = jnp.pad(x, ((0, Bp - B), (0, 0), (0, 0)))

    # Explicit scoped-VMEM budget: (8,128)-padded x tile + lane-dense out tile,
    # double-buffered, plus the f32 kqv / scores / softmax temporaries.
    lane = 128
    x_tile = block_b * T * lane * 4                      # C=64 pads to 128 lanes
    out_tile = block_b * _round_up(T * H, lane) * 4      # lane-dense f32 output tile
    tmp = 6 * block_b * T * lane * 4                     # kqv / wei / p / acc temporaries
    vmem_limit = int(min(max(2 * x_tile + 2 * out_tile + tmp + (1 << 20), 32 << 20),
                         48 << 20))                      # safe on v5e/v6e/v7x

    cost = pl.CostEstimate(
        flops=2 * Bp * T * C * 3 * H + 4 * Bp * T * T * H,
        transcendentals=Bp * T * T,
        bytes_accessed=Bp * T * (C + H) * 4 + C * 3 * H * 2,
    )

    out = pl.pallas_call(
        _head_kernel,
        out_shape=jax.ShapeDtypeStruct((Bp, T * H), x.dtype),
        grid_spec=pltpu.PrefetchScalarGridSpec(
            num_scalar_prefetch=0,
            grid=(num_blocks,),
            in_specs=[
                pl.BlockSpec((block_b, T, C), lambda b: (b, 0, 0)),
                pl.BlockSpec((C, 3 * H), lambda b: (0, 0)),
            ],
            out_specs=pl.BlockSpec((block_b, T * H), lambda b: (b, 0)),
        ),
        compiler_params=pltpu.CompilerParams(
            dimension_semantics=("parallel",),
            vmem_limit_bytes=vmem_limit,
        ),
        cost_estimate=cost,
    )(x, w)

    out = out.reshape(Bp, T, H)
    if Bp != B:
        out = out[:B]
    return out


def reference_forward(x, wk, wq, wv):
    """Pure-JAX (f32) reference replicating the PyTorch forward semantics."""
    B, T, C = x.shape
    k = x @ wk
    q = x @ wq
    v = x @ wv
    wei = (q @ jnp.swapaxes(k, -2, -1)) * (C ** -0.5)
    tril = jnp.tril(jnp.ones((T, T), dtype=bool))
    wei = jnp.where(tril, wei, -jnp.inf)
    wei = jax.nn.softmax(wei, axis=-1)
    return wei @ v


if __name__ == "__main__":
    key = jax.random.PRNGKey(0)
    k_x, k_wk, k_wq, k_wv = jax.random.split(key, 4)

    C, H = n_embd, head_size

    # Deterministic Linear(bias=False)-style init, stored transposed as (C, H).
    bound = 1.0 / (C ** 0.5)
    wk = jax.random.uniform(k_wk, (C, H), jnp.float32, -bound, bound)
    wq = jax.random.uniform(k_wq, (C, H), jnp.float32, -bound, bound)
    wv = jax.random.uniform(k_wv, (C, H), jnp.float32, -bound, bound)

    # Cases exercise: default block_b with short T, a multi-step grid with batch
    # padding (B=20 -> Bp=24 at block_b=8), and the default block_b at T=block_size.
    for B, T, bb in [(4, 8, None), (20, block_size, 8), (16, block_size, None)]:
        x = jax.random.normal(jax.random.fold_in(k_x, B * 100 + T),
                              (B, T, C), dtype=jnp.float32)

        out = jax.block_until_ready(head_forward(x, wk, wq, wv, block_b=bb))
        ref = reference_forward(x, wk, wq, wv)

        assert out.shape == (B, T, H)
        # bf16 MXU inputs (f32 accumulation) -> tolerance covers bf16 rounding.
        assert jnp.allclose(out, ref, atol=3e-2, rtol=3e-2), "mismatch vs reference"

    print("KERNEL_OK")
</pallas_src>

<mosaic_0001>
module attributes {stable_mosaic.version = 11 : i64} {
  func.func @_head_kernel(%arg0: i32, %arg1: memref<8x8x64xf32, #tpu.memory_space<vmem>>, %arg2: memref<64x48xbf16, #tpu.memory_space<vmem>>, %arg3: memref<8x128xf32, #tpu.memory_space<vmem>>) attributes {dimension_semantics = [#tpu.dimension_semantics<parallel>], iteration_bounds = array<i64: 1>, scalar_prefetch = 0 : i64, scratch_operands = 0 : i64, tpu.core_type = #tpu.core_type<tc>, window_params = [{transform_indices = @transform_0, window_bounds = array<i64: 8, 8, 64>}, {pipeline_mode = #tpu.pipeline_mode<synchronous>, transform_indices = @transform_1, window_bounds = array<i64: 64, 48>}, {transform_indices = @transform_2, window_bounds = array<i64: 8, 128>}]} {
    %c0 = arith.constant 0 : index
    %c0_0 = arith.constant 0 : index
    %c0_1 = arith.constant 0 : index
    %0 = vector.load %arg1[%c0, %c0_0, %c0_1] : memref<8x8x64xf32, #tpu.memory_space<vmem>>, vector<8x8x64xf32>
    %1 = vector.shape_cast %0 : vector<8x8x64xf32> to vector<64x64xf32>
    %2 = arith.truncf %1 : vector<64x64xf32> to vector<64x64xbf16>
    %c0_2 = arith.constant 0 : index
    %c0_3 = arith.constant 0 : index
    %3 = vector.load %arg2[%c0_2, %c0_3] : memref<64x48xbf16, #tpu.memory_space<vmem>>, vector<64x48xbf16>
    %cst = arith.constant dense<0.000000e+00> : vector<64x48xf32>
    %4 = tpu.matmul %2, %3, %cst {dimension_numbers = #tpu.dot_dimension_numbers<[1], [0], [0], [1], [0, 0, 1, 1], [], []>} : vector<64x64xbf16>, vector<64x48xbf16>, vector<64x48xf32> -> vector<64x48xf32>
    %5 = vector.shape_cast %4 : vector<64x48xf32> to vector<8x8x48xf32>
    %6 = arith.truncf %5 : vector<8x8x48xf32> to vector<8x8x48xbf16>
    %7 = vector.extract_strided_slice %6 {offsets = [0, 0, 0], sizes = [8, 8, 16], strides = [1, 1, 1]} : vector<8x8x48xbf16> to vector<8x8x16xbf16>
    %8 = vector.extract_strided_slice %6 {offsets = [0, 0, 16], sizes = [8, 8, 16], strides = [1, 1, 1]} : vector<8x8x48xbf16> to vector<8x8x16xbf16>
    %9 = vector.extract_strided_slice %6 {offsets = [0, 0, 32], sizes = [8, 8, 16], strides = [1, 1, 1]} : vector<8x8x48xbf16> to vector<8x8x16xbf16>
    "tpu.trace_start"() <{level = 10 : i32, message = "bth,bsh->bts"}> : () -> ()
    %cst_4 = arith.constant dense<0.000000e+00> : vector<8x8x8xf32>
    %10 = tpu.matmul %8, %7, %cst_4 {dimension_numbers = #tpu.dot_dimension_numbers<[2], [2], [1], [1], [0, 0, 0, 1, 1, 1], [0], [0]>} : vector<8x8x16xbf16>, vector<8x8x16xbf16>, vector<8x8x8xf32> -> vector<8x8x8xf32>
    "tpu.trace_stop"() : () -> ()
    %11 = tpu.iota {dimensions = array<i32: 0>} : vector<8x8xi32>
    %12 = tpu.iota {dimensions = array<i32: 1>} : vector<8x8xi32>
    %13 = arith.cmpi sle, %12, %11 : vector<8x8xi32>
    %14 = vector.shape_cast %13 : vector<8x8xi1> to vector<1x8x8xi1>
    %cst_5 = arith.constant -1.000000e+30 : f32
    %15 = vector.shape_cast %14 : vector<1x8x8xi1> to vector<1x8x8xi1>
    %16 = vector.broadcast %15 : vector<1x8x8xi1> to vector<8x8x8xi1>
    %17 = vector.broadcast %cst_5 : f32 to vector<8x8x8xf32>
    %18 = arith.select %16, %10, %17 : vector<8x8x8xi1>, vector<8x8x8xf32>
    %cst_6 = arith.constant dense<0xFF800000> : vector<8x8xf32>
    %19 = vector.multi_reduction <maximumf>, %18, %cst_6 [2] : vector<8x8x8xf32> to vector<8x8xf32>
    %20 = vector.shape_cast %19 : vector<8x8xf32> to vector<8x8x1xf32>
    %21 = vector.broadcast %20 : vector<8x8x1xf32> to vector<8x8x8xf32>
    %22 = arith.subf %18, %21 : vector<8x8x8xf32>
    %23 = math.exp %22 : vector<8x8x8xf32>
    %cst_7 = arith.constant dense<0.000000e+00> : vector<8x8xf32>
    %24 = vector.multi_reduction <add>, %23, %cst_7 [2] : vector<8x8x8xf32> to vector<8x8xf32>
    %25 = vector.shape_cast %24 : vector<8x8xf32> to vector<8x8x1xf32>
    %26 = tpu.reciprocal %25 {approx = true} : vector<8x8x1xf32> -> vector<8x8x1xf32>
    %27 = vector.broadcast %26 : vector<8x8x1xf32> to vector<8x8x8xf32>
    %28 = arith.mulf %23, %27 : vector<8x8x8xf32>
    %29 = arith.truncf %28 : vector<8x8x8xf32> to vector<8x8x8xbf16>
    "tpu.trace_start"() <{level = 10 : i32, message = "bts,bsh->bth"}> : () -> ()
    %cst_8 = arith.constant dense<0.000000e+00> : vector<8x8x16xf32>
    %30 = tpu.matmul %29, %9, %cst_8 {dimension_numbers = #tpu.dot_dimension_numbers<[2], [1], [1], [2], [0, 0, 0, 1, 1, 2], [0], [0]>} : vector<8x8x8xbf16>, vector<8x8x16xbf16>, vector<8x8x16xf32> -> vector<8x8x16xf32>
    "tpu.trace_stop"() : () -> ()
    %31 = vector.shape_cast %30 : vector<8x8x16xf32> to vector<8x128xf32>
    %c0_9 = arith.constant 0 : index
    %c0_10 = arith.constant 0 : index
    %32 = vector.load %arg3[%c0_9, %c0_10] : memref<8x128xf32, #tpu.memory_space<vmem>>, vector<8x128xf32>
    tpu.vector_store %arg3[%c0_9, %c0_10], %31 {strides = array<i32>} : memref<8x128xf32, #tpu.memory_space<vmem>>, vector<8x128xf32>,
    return
  }
  func.func @transform_0(%arg0: i32) -> (i32, i32, i32) {
    %c0_i32 = arith.constant 0 : i32
    %c0_i32_0 = arith.constant 0 : i32
    %c0_i32_1 = arith.constant 0 : i32
    return %arg0, %c0_i32, %c0_i32_0 : i32, i32, i32
  }
  func.func @transform_1(%arg0: i32) -> (i32, i32) {
    %c0_i32 = arith.constant 0 : i32
    %c0_i32_0 = arith.constant 0 : i32
    %c0_i32_1 = arith.constant 0 : i32
    return %c0_i32, %c0_i32_0 : i32, i32
  }
  func.func @transform_2(%arg0: i32) -> (i32, i32) {
    %c0_i32 = arith.constant 0 : i32
    %c0_i32_0 = arith.constant 0 : i32
    return %arg0, %c0_i32 : i32, i32
  }
}

</mosaic_0001>

<llo_original>
// kernel: tpu_custom_call.1
$region0: #{tpu_custom_call.1}
  #allocation0 [shape = 'u32[]', space=smem, size = 0x4, offset = 0x4, fixed_abs, tag = 'smem constant byte address 0x4 - core index']
  #allocation1 [shape = 'u32[144,128]{1,0:T(1,128)}', space=vmem, size = 0x12000, scoped, tag = 'internal scratch']
  %s0 = inlined_call_operand.hbm [shape: f32[8,8,64], index: 0, kind: input, shape index: {}]
  %s1 = inlined_call_operand.vmem [shape: bf16[64,48], index: 1, kind: input, shape index: {}]
  %s2 = inlined_call_operand.hbm [shape: f32[8,128], index: 2, kind: output, shape index: {}]
  %s3 = sld [smem:[#allocation0]]
  $region22: #{tpu_custom_call.1} parent=0
    _
  %s5 = ssub.s32 1, %s3
  %s6 = scalar_select 0, %s5, %s3
  $region1: #{tpu_custom_call.1} parent=0
    #allocation2 [shape = 'u8[32768]{0}', space=vmem, size = 0x8000, scoped, tag = 'input window, operand 0, single buffered']
    #allocation3 [shape = 's32[1]{0}', space=sflag, size = 0x4, scoped, tag = 'scoped memory for tpu_custom_call.1']
    #allocation4 [shape = 's32[1]{0}', space=sflag, size = 0x4, scoped, tag = 'scoped memory for tpu_custom_call.1']
    #allocation5 [shape = 'u8[4096]{0}', space=vmem, size = 0x1000, scoped, tag = 'output window, operand 0, single buffered']
    %7 = vsyncpa [#allocation3], 0
    %8 = vsyncpa [#allocation4], 0
    // Predicated region
    $region2: #{tpu_custom_call.1} parent=1 // pred_check
      _
    $region3: #{tpu_custom_call.1} parent=1 // pred_check_branch
      %10 = sbr.rel (0) target = $region5
    $region4: #{tpu_custom_call.1} parent=1 // pred_region
      %s12 = ssub.s32 1024, 1024
      %13 = vsyncadd [#allocation3], %s12
      %s14 = sshll.u32 [#allocation2], 4
      %s15 = int_to_ptr.vmem [resolvable:$true] %s14
      %20 = dma.hbm_to_vmem [thread:$0]  %s0, 1024, %s15, [#allocation3], 128, 128, 8
    $region5: #{tpu_custom_call.1} parent=1 // pred_fallthru
      _
    // Predicated region
    $region6: #{tpu_custom_call.1} parent=1 // pred_check
      _
    $region7: #{tpu_custom_call.1} parent=1 // pred_check_branch
      %22 = sbr.rel (0) target = $region9
    $region8: #{tpu_custom_call.1} parent=1 // pred_region
      _
    $region9: #{tpu_custom_call.1} parent=1 // pred_fallthru
      _
    // Predicated region
    $region10: #{tpu_custom_call.1} parent=1 // pred_check
      _
    $region11: #{tpu_custom_call.1} parent=1 // pred_check_branch
      %24 = sbr.rel (0) target = $region13
    $region12: #{tpu_custom_call.1} parent=1 // pred_region
      %25 = dma.done [#allocation3], 1024
    $region13: #{tpu_custom_call.1} parent=1 // pred_fallthru
      _
    %v27 = vld [vmem:[#allocation2] sm:$0xff]
    %v28 = vld [vmem:[#allocation2 + $0x8] sm:$0xff]
    %v29 = vld [vmem:[#allocation2 + $0x10] sm:$0xff]
    %v30 = vld [vmem:[#allocation2 + $0x18] sm:$0xff]
    %v31 = vld [vmem:[#allocation2 + $0x20] sm:$0xff]
    %v32 = vld [vmem:[#allocation2 + $0x28] sm:$0xff]
    %v33 = vld [vmem:[#allocation2 + $0x30] sm:$0xff]
    %v34 = vld [vmem:[#allocation2 + $0x38] sm:$0xff]
    %v35 = vpack.c.bf16 %v28, %v27
    %v36 = vpack.c.bf16 %v30, %v29
    %v37 = vpack.c.bf16 %v32, %v31
    %v38 = vpack.c.bf16 %v34, %v33
    %v39 = vld [vmem:[%s1] sm:$0xf]
    %v40 = vld [vmem:[%s1 + $0x4] sm:$0xf]
    %v41 = vld [vmem:[%s1 + $0x8] sm:$0xf]
    %v42 = vld [vmem:[%s1 + $0xc] sm:$0xf]
    %v43 = vld [vmem:[%s1 + $0x10] sm:$0xf]
    %v44 = vld [vmem:[%s1 + $0x14] sm:$0xf]
    %v45 = vld [vmem:[%s1 + $0x18] sm:$0xf]
    %v46 = vld [vmem:[%s1 + $0x1c] sm:$0xf]
    %v55 = vunpack.c.l.b16 %v39
    %v56 = vunpack.c.l.b16 %v40
    %v57 = vunpack.c.l.b16 %v41
    %v58 = vunpack.c.l.b16 %v42
    %v59 = vunpack.c.l.b16 %v43
    %v60 = vunpack.c.l.b16 %v44
    %v61 = vunpack.c.l.b16 %v45
    %v62 = vunpack.c.l.b16 %v46
    %v63 = vpack.c.b16 %v56, %v55
    %v64 = vpack.c.b16 %v58, %v57
    %v65 = vpack.c.b16 %v60, %v59
    %v66 = vpack.c.b16 %v62, %v61
    %vm71 = vcmask 523264
    %v73 = vsel %vm71, %v35, 0
    %v76 = vsel %vm71, %v36, 0
    %v79 = vsel %vm71, %v37, 0
    %v82 = vsel %vm71, %v38, 0
    %84 = vmatprep.subr.bf16.mxu0 0
    %85 = vmatpush1.bf16.msra.mxu0 0
    %86 = vmatprep.subr.bf16.mxu0 0
    %87 = vmatpush1.bf16.msra.mxu0 0
    %88 = vmatprep.subr.bf16.mxu0 0
    %89 = vmatpush1.bf16.msra.mxu0 0
    %90 = vmatprep.subr.bf16.mxu0 0
    %91 = vmatpush1.bf16.msra.mxu0 0
    %92 = vmatprep.subr.bf16.mxu0 0
    %93 = vmatpush1.bf16.msra.mxu0 %v66
    %94 = vmatprep.subr.bf16.mxu0 0
    %95 = vmatpush1.bf16.msra.mxu0 %v65
    %96 = vmatprep.subr.bf16.mxu0 0
    %97 = vmatpush1.bf16.msra.mxu0 %v64
    %98 = vmatprep.subr.bf16.mxu0 0
    %99 = vmatpush1.bf16.msra.mxu0 %v63
    %100 = vmatprep.subr.bf16.mxu0 0
    %101 = vmatpush2.bf16.msra.mxu0 0
    %102 = vmatprep.subr.bf16.mxu0 0
    %103 = vmatpush2.bf16.msra.mxu0 0
    %104 = vmatprep.subr.bf16.mxu0 0
    %105 = vmatpush2.bf16.msra.mxu0 0
    %106 = vmatprep.subr.bf16.mxu0 0
    %107 = vmatpush2.bf16.msra.mxu0 0
    %108 = vmatprep.subr.bf16.mxu0 0
    %109 = vmatpush2.bf16.msra.mxu0 0
    %110 = vmatprep.subr.bf16.mxu0 0
    %111 = vmatpush2.bf16.msra.mxu0 0
    %112 = vmatprep.subr.bf16.mxu0 0
    %113 = vmatpush2.bf16.msra.mxu0 0
    %114 = vmatprep.subr.bf16.mxu0 0
    %115 = vmatpush2.bf16.msra.mxu0 0
    %116 = vmatprep.mubr.bf16.mxu0 0
    %117 = vmatmul.mubr.bf16.gmra.mxu0 %v73
    %v118 = vpop.f32.mrf.mxu0
    %v119 = vadd.f32 0.0, %v118
    %v120 = vpop.f32.mrf.mxu0
    %v121 = vpop.f32.mrf.mxu0
    %v122 = vadd.f32 0.0, %v121
    %v123 = vpop.f32.mrf.mxu0
    %124 = vmatprep.mubr.bf16.mxu0 0
    %125 = vmatmul.mubr.bf16.gmra.mxu0 %v76
    %v126 = vpop.f32.mrf.mxu0
    %v127 = vadd.f32 0.0, %v126
    %v128 = vpop.f32.mrf.mxu0
    %v129 = vpop.f32.mrf.mxu0
    %v130 = vadd.f32 0.0, %v129
    %v131 = vpop.f32.mrf.mxu0
    %132 = vmatprep.mubr.bf16.mxu0 0
    %133 = vmatmul.mubr.bf16.gmra.mxu0 %v79
    %v134 = vpop.f32.mrf.mxu0
    %v135 = vadd.f32 0.0, %v134
    %v136 = vpop.f32.mrf.mxu0
    %v137 = vpop.f32.mrf.mxu0
    %v138 = vadd.f32 0.0, %v137
    %v139 = vpop.f32.mrf.mxu0
    %140 = vmatprep.mubr.bf16.mxu0 0
    %141 = vmatmul.mubr.bf16.gmra.mxu0 %v82
    %v142 = vpop.f32.mrf.mxu0
    %v143 = vadd.f32 0.0, %v142
    %v144 = vpop.f32.mrf.mxu0
    %v145 = vpop.f32.mrf.mxu0
    %v146 = vadd.f32 0.0, %v145
    %v147 = vpop.f32.mrf.mxu0
    %148 = vdwg.mxu0
    %v149 = vpack.c.bf16 %v119, %v119
    %v150 = vpack.c.bf16 %v122, %v122
    %v151 = vpack.c.bf16 %v127, %v127
    %v152 = vpack.c.bf16 %v130, %v130
    %v153 = vpack.c.bf16 %v135, %v135
    %v154 = vpack.c.bf16 %v138, %v138
    %v155 = vpack.c.bf16 %v143, %v143
    %v156 = vpack.c.bf16 %v146, %v146
    %158 = vrot.lane.b32.xlu0 %v149, 112
    %v159 = vpop.permute.xlu0 %158
    %vm160 = vcmask 130048
    %v162 = vsel %vm160, %v159, 0
    %v165 = vsel %vm160, %v149, 0
    %167 = vmatprep.subr.bf16.mxu0 0
    %168 = vmatpush1.bf16.xpose.msra.mxu0 0
    %169 = vmatprep.subr.bf16.mxu0 0
    %170 = vmatpush1.bf16.xpose.msra.mxu0 0
    %171 = vmatprep.subr.bf16.mxu0 0
    %172 = vmatpush1.bf16.xpose.msra.mxu0 0
    %173 = vmatprep.subr.bf16.mxu0 0
    %174 = vmatpush1.bf16.xpose.msra.mxu0 0
    %175 = vmatprep.subr.bf16.mxu0 0
    %176 = vmatpush1.bf16.xpose.msra.mxu0 0
    %177 = vmatprep.subr.bf16.mxu0 0
    %178 = vmatpush1.bf16.xpose.msra.mxu0 0
    %179 = vmatprep.subr.bf16.mxu0 0
    %180 = vmatpush1.bf16.xpose.msra.mxu0 0
    %181 = vmatprep.subr.bf16.mxu0 0
    %182 = vmatpush1.bf16.xpose.msra.mxu0 %v165
    %183 = vmatprep.subr.bf16.mxu0 0
    %184 = vmatpush2.bf16.xpose.msra.mxu0 0
    %185 = vmatprep.subr.bf16.mxu0 0
    %186 = vmatpush2.bf16.xpose.msra.mxu0 0
    %187 = vmatprep.subr.bf16.mxu0 0
    %188 = vmatpush2.bf16.xpose.msra.mxu0 0
    %189 = vmatprep.subr.bf16.mxu0 0
    %190 = vmatpush2.bf16.xpose.msra.mxu0 0
    %191 = vmatprep.subr.bf16.mxu0 0
    %192 = vmatpush2.bf16.xpose.msra.mxu0 0
    %193 = vmatprep.subr.bf16.mxu0 0
    %194 = vmatpush2.bf16.xpose.msra.mxu0 0
    %195 = vmatprep.subr.bf16.mxu0 0
    %196 = vmatpush2.bf16.xpose.msra.mxu0 0
    %197 = vmatprep.subr.bf16.mxu0 0
    %198 = vmatpush2.bf16.xpose.msra.mxu0 0
    %199 = vmatprep.mubr.bf16.mxu0 0
    %200 = vmatmul.mubr.bf16.gmra.mxu0 %v162
    %v201 = vpop.f32.mrf.mxu0
    %v202 = vadd.f32 0.0, %v201
    %v203 = vpop.f32.mrf.mxu0
    %v204 = vpop.f32.mrf.mxu0
    %v205 = vpop.f32.mrf.mxu0
    %206 = vdwg.mxu0
    %208 = vrot.lane.b32.xlu0 %v150, 112
    %v209 = vpop.permute.xlu0 %208
    %v211 = vsel %vm160, %v209, 0
    %v214 = vsel %vm160, %v150, 0
    %216 = vmatprep.subr.bf16.mxu0 0
    %217 = vmatpush1.bf16.xpose.msra.mxu0 0
    %218 = vmatprep.subr.bf16.mxu0 0
    %219 = vmatpush1.bf16.xpose.msra.mxu0 0
    %220 = vmatprep.subr.bf16.mxu0 0
    %221 = vmatpush1.bf16.xpose.msra.mxu0 0
    %222 = vmatprep.subr.bf16.mxu0 0
    %223 = vmatpush1.bf16.xpose.msra.mxu0 0
    %224 = vmatprep.subr.bf16.mxu0 0
    %225 = vmatpush1.bf16.xpose.msra.mxu0 0
    %226 = vmatprep.subr.bf16.mxu0 0
    %227 = vmatpush1.bf16.xpose.msra.mxu0 0
    %228 = vmatprep.subr.bf16.mxu0 0
    %229 = vmatpush1.bf16.xpose.msra.mxu0 0
    %230 = vmatprep.subr.bf16.mxu0 0
    %231 = vmatpush1.bf16.xpose.msra.mxu0 %v214
    %232 = vmatprep.subr.bf16.mxu0 0
    %233 = vmatpush2.bf16.xpose.msra.mxu0 0
    %234 = vmatprep.subr.bf16.mxu0 0
    %235 = vmatpush2.bf16.xpose.msra.mxu0 0
    %236 = vmatprep.subr.bf16.mxu0 0
    %237 = vmatpush2.bf16.xpose.msra.mxu0 0
    %238 = vmatprep.subr.bf16.mxu0 0
    %239 = vmatpush2.bf16.xpose.msra.mxu0 0
    %240 = vmatprep.subr.bf16.mxu0 0
    %241 = vmatpush2.bf16.xpose.msra.mxu0 0
    %242 = vmatprep.subr.bf16.mxu0 0
    %243 = vmatpush2.bf16.xpose.msra.mxu0 0
    %244 = vmatprep.subr.bf16.mxu0 0
    %245 = vmatpush2.bf16.xpose.msra.mxu0 0
    %246 = vmatprep.subr.bf16.mxu0 0
    %247 = vmatpush2.bf16.xpose.msra.mxu0 0
    %248 = vmatprep.mubr.bf16.mxu0 0
    %249 = vmatmul.mubr.bf16.gmra.mxu0 %v211
    %v250 = vpop.f32.mrf.mxu0
    %v251 = vadd.f32 0.0, %v250
    %v252 = vpop.f32.mrf.mxu0
    %v253 = vpop.f32.mrf.mxu0
    %v254 = vpop.f32.mrf.mxu0
    %255 = vdwg.mxu0
    %257 = vrot.lane.b32.xlu0 %v151, 112
    %v258 = vpop.permute.xlu0 %257
    %v260 = vsel %vm160, %v258, 0
    %v263 = vsel %vm160, %v151, 0
    %265 = vmatprep.subr.bf16.mxu0 0
    %266 = vmatpush1.bf16.xpose.msra.mxu0 0
    %267 = vmatprep.subr.bf16.mxu0 0
    %268 = vmatpush1.bf16.xpose.msra.mxu0 0
    %269 = vmatprep.subr.bf16.mxu0 0
    %270 = vmatpush1.bf16.xpose.msra.mxu0 0
    %271 = vmatprep.subr.bf16.mxu0 0
    %272 = vmatpush1.bf16.xpose.msra.mxu0 0
    %273 = vmatprep.subr.bf16.mxu0 0
    %274 = vmatpush1.bf16.xpose.msra.mxu0 0
    %275 = vmatprep.subr.bf16.mxu0 0
    %276 = vmatpush1.bf16.xpose.msra.mxu0 0
    %277 = vmatprep.subr.bf16.mxu0 0
    %278 = vmatpush1.bf16.xpose.msra.mxu0 0
    %279 = vmatprep.subr.bf16.mxu0 0
    %280 = vmatpush1.bf16.xpose.msra.mxu0 %v263
    %281 = vmatprep.subr.bf16.mxu0 0
    %282 = vmatpush2.bf16.xpose.msra.mxu0 0
    %283 = vmatprep.subr.bf16.mxu0 0
    %284 = vmatpush2.bf16.xpose.msra.mxu0 0
    %285 = vmatprep.subr.bf16.mxu0 0
    %286 = vmatpush2.bf16.xpose.msra.mxu0 0
    %287 = vmatprep.subr.bf16.mxu0 0
    %288 = vmatpush2.bf16.xpose.msra.mxu0 0
    %289 = vmatprep.subr.bf16.mxu0 0
    %290 = vmatpush2.bf16.xpose.msra.mxu0 0
    %291 = vmatprep.subr.bf16.mxu0 0
    %292 = vmatpush2.bf16.xpose.msra.mxu0 0
    %293 = vmatprep.subr.bf16.mxu0 0
    %294 = vmatpush2.bf16.xpose.msra.mxu0 0
    %295 = vmatprep.subr.bf16.mxu0 0
    %296 = vmatpush2.bf16.xpose.msra.mxu0 0
    %297 = vmatprep.mubr.bf16.mxu0 0
    %298 = vmatmul.mubr.bf16.gmra.mxu0 %v260
    %v299 = vpop.f32.mrf.mxu0
    %v300 = vadd.f32 0.0, %v299
    %v301 = vpop.f32.mrf.mxu0
    %v302 = vpop.f32.mrf.mxu0
    %v303 = vpop.f32.mrf.mxu0
    %304 = vdwg.mxu0
    %306 = vrot.lane.b32.xlu0 %v152, 112
    %v307 = vpop.permute.xlu0 %306
    %v309 = vsel %vm160, %v307, 0
    %v312 = vsel %vm160, %v152, 0
    %314 = vmatprep.subr.bf16.mxu0 0
    %315 = vmatpush1.bf16.xpose.msra.mxu0 0
    %316 = vmatprep.subr.bf16.mxu0 0
    %317 = vmatpush1.bf16.xpose.msra.mxu0 0
    %318 = vmatprep.subr.bf16.mxu0 0
    %319 = vmatpush1.bf16.xpose.msra.mxu0 0
    %320 = vmatprep.subr.bf16.mxu0 0
    %321 = vmatpush1.bf16.xpose.msra.mxu0 0
    %322 = vmatprep.subr.bf16.mxu0 0
    %323 = vmatpush1.bf16.xpose.msra.mxu0 0
    %324 = vmatprep.subr.bf16.mxu0 0
    %325 = vmatpush1.bf16.xpose.msra.mxu0 0
    %326 = vmatprep.subr.bf16.mxu0 0
    %327 = vmatpush1.bf16.xpose.msra.mxu0 0
    %328 = vmatprep.subr.bf16.mxu0 0
    %329 = vmatpush1.bf16.xpose.msra.mxu0 %v312
    %330 = vmatprep.subr.bf16.mxu0 0
    %331 = vmatpush2.bf16.xpose.msra.mxu0 0
    %332 = vmatprep.subr.bf16.mxu0 0
    %333 = vmatpush2.bf16.xpose.msra.mxu0 0
    %334 = vmatprep.subr.bf16.mxu0 0
    %335 = vmatpush2.bf16.xpose.msra.mxu0 0
    %336 = vmatprep.subr.bf16.mxu0 0
    %337 = vmatpush2.bf16.xpose.msra.mxu0 0
    %338 = vmatprep.subr.bf16.mxu0 0
    %339 = vmatpush2.bf16.xpose.msra.mxu0 0
    %340 = vmatprep.subr.bf16.mxu0 0
    %341 = vmatpush2.bf16.xpose.msra.mxu0 0
    %342 = vmatprep.subr.bf16.mxu0 0
    %343 = vmatpush2.bf16.xpose.msra.mxu0 0
    %344 = vmatprep.subr.bf16.mxu0 0
    %345 = vmatpush2.bf16.xpose.msra.mxu0 0
    %346 = vmatprep.mubr.bf16.mxu0 0
    %347 = vmatmul.mubr.bf16.gmra.mxu0 %v309
    %v348 = vpop.f32.mrf.mxu0
    %v349 = vadd.f32 0.0, %v348
    %v350 = vpop.f32.mrf.mxu0
    %v351 = vpop.f32.mrf.mxu0
    %v352 = vpop.f32.mrf.mxu0
    %353 = vdwg.mxu0
    %355 = vrot.lane.b32.xlu0 %v153, 112
    %v356 = vpop.permute.xlu0 %355
    %v358 = vsel %vm160, %v356, 0
    %v361 = vsel %vm160, %v153, 0
    %363 = vmatprep.subr.bf16.mxu0 0
    %364 = vmatpush1.bf16.xpose.msra.mxu0 0
    %365 = vmatprep.subr.bf16.mxu0 0
    %366 = vmatpush1.bf16.xpose.msra.mxu0 0
    %367 = vmatprep.subr.bf16.mxu0 0
    %368 = vmatpush1.bf16.xpose.msra.mxu0 0
    %369 = vmatprep.subr.bf16.mxu0 0
    %370 = vmatpush1.bf16.xpose.msra.mxu0 0
    %371 = vmatprep.subr.bf16.mxu0 0
    %372 = vmatpush1.bf16.xpose.msra.mxu0 0
    %373 = vmatprep.subr.bf16.mxu0 0
    %374 = vmatpush1.bf16.xpose.msra.mxu0 0
    %375 = vmatprep.subr.bf16.mxu0 0
    %376 = vmatpush1.bf16.xpose.msra.mxu0 0
    %377 = vmatprep.subr.bf16.mxu0 0
    %378 = vmatpush1.bf16.xpose.msra.mxu0 %v361
    %379 = vmatprep.subr.bf16.mxu0 0
    %380 = vmatpush2.bf16.xpose.msra.mxu0 0
    %381 = vmatprep.subr.bf16.mxu0 0
    %382 = vmatpush2.bf16.xpose.msra.mxu0 0
    %383 = vmatprep.subr.bf16.mxu0 0
    %384 = vmatpush2.bf16.xpose.msra.mxu0 0
    %385 = vmatprep.subr.bf16.mxu0 0
    %386 = vmatpush2.bf16.xpose.msra.mxu0 0
    %387 = vmatprep.subr.bf16.mxu0 0
    %388 = vmatpush2.bf16.xpose.msra.mxu0 0
    %389 = vmatprep.subr.bf16.mxu0 0
    %390 = vmatpush2.bf16.xpose.msra.mxu0 0
    %391 = vmatprep.subr.bf16.mxu0 0
    %392 = vmatpush2.bf16.xpose.msra.mxu0 0
    %393 = vmatprep.subr.bf16.mxu0 0
    %394 = vmatpush2.bf16.xpose.msra.mxu0 0
    %395 = vmatprep.mubr.bf16.mxu0 0
    %396 = vmatmul.mubr.bf16.gmra.mxu0 %v358
    %v397 = vpop.f32.mrf.mxu0
    %v398 = vadd.f32 0.0, %v397
    %v399 = vpop.f32.mrf.mxu0
    %v400 = vpop.f32.mrf.mxu0
    %v401 = vpop.f32.mrf.mxu0
    %402 = vdwg.mxu0
    %404 = vrot.lane.b32.xlu0 %v154, 112
    %v405 = vpop.permute.xlu0 %404
    %v407 = vsel %vm160, %v405, 0
    %v410 = vsel %vm160, %v154, 0
    %412 = vmatprep.subr.bf16.mxu0 0
    %413 = vmatpush1.bf16.xpose.msra.mxu0 0
    %414 = vmatprep.subr.bf16.mxu0 0
    %415 = vmatpush1.bf16.xpose.msra.mxu0 0
    %416 = vmatprep.subr.bf16.mxu0 0
    %417 = vmatpush1.bf16.xpose.msra.mxu0 0
    %418 = vmatprep.subr.bf16.mxu0 0
    %419 = vmatpush1.bf16.xpose.msra.mxu0 0
    %420 = vmatprep.subr.bf16.mxu0 0
    %421 = vmatpush1.bf16.xpose.msra.mxu0 0
    %422 = vmatprep.subr.bf16.mxu0 0
    %423 = vmatpush1.bf16.xpose.msra.mxu0 0
    %424 = vmatprep.subr.bf16.mxu0 0
    %425 = vmatpush1.bf16.xpose.msra.mxu0 0
    %426 = vmatprep.subr.bf16.mxu0 0
    %427 = vmatpush1.bf16.xpose.msra.mxu0 %v410
    %428 = vmatprep.subr.bf16.mxu0 0
    %429 = vmatpush2.bf16.xpose.msra.mxu0 0
    %430 = vmatprep.subr.bf16.mxu0 0
    %431 = vmatpush2.bf16.xpose.msra.mxu0 0
    %432 = vmatprep.subr.bf16.mxu0 0
    %433 = vmatpush2.bf16.xpose.msra.mxu0 0
    %434 = vmatprep.subr.bf16.mxu0 0
    %435 = vmatpush2.bf16.xpose.msra.mxu0 0
    %436 = vmatprep.subr.bf16.mxu0 0
    %437 = vmatpush2.bf16.xpose.msra.mxu0 0
    %438 = vmatprep.subr.bf16.mxu0 0
    %439 = vmatpush2.bf16.xpose.msra.mxu0 0
    %440 = vmatprep.subr.bf16.mxu0 0
    %441 = vmatpush2.bf16.xpose.msra.mxu0 0
    %442 = vmatprep.subr.bf16.mxu0 0
    %443 = vmatpush2.bf16.xpose.msra.mxu0 0
    %444 = vmatprep.mubr.bf16.mxu0 0
    %445 = vmatmul.mubr.bf16.gmra.mxu0 %v407
    %v446 = vpop.f32.mrf.mxu0
    %v447 = vadd.f32 0.0, %v446
    %v448 = vpop.f32.mrf.mxu0
    %v449 = vpop.f32.mrf.mxu0
    %v450 = vpop.f32.mrf.mxu0
    %451 = vdwg.mxu0
    %453 = vrot.lane.b32.xlu0 %v155, 112
    %v454 = vpop.permute.xlu0 %453
    %v456 = vsel %vm160, %v454, 0
    %v459 = vsel %vm160, %v155, 0
    %461 = vmatprep.subr.bf16.mxu0 0
    %462 = vmatpush1.bf16.xpose.msra.mxu0 0
    %463 = vmatprep.subr.bf16.mxu0 0
    %464 = vmatpush1.bf16.xpose.msra.mxu0 0
    %465 = vmatprep.subr.bf16.mxu0 0
    %466 = vmatpush1.bf16.xpose.msra.mxu0 0
    %467 = vmatprep.subr.bf16.mxu0 0
    %468 = vmatpush1.bf16.xpose.msra.mxu0 0
    %469 = vmatprep.subr.bf16.mxu0 0
    %470 = vmatpush1.bf16.xpose.msra.mxu0 0
    %471 = vmatprep.subr.bf16.mxu0 0
    %472 = vmatpush1.bf16.xpose.msra.mxu0 0
    %473 = vmatprep.subr.bf16.mxu0 0
    %474 = vmatpush1.bf16.xpose.msra.mxu0 0
    %475 = vmatprep.subr.bf16.mxu0 0
    %476 = vmatpush1.bf16.xpose.msra.mxu0 %v459
    %477 = vmatprep.subr.bf16.mxu0 0
    %478 = vmatpush2.bf16.xpose.msra.mxu0 0
    %479 = vmatprep.subr.bf16.mxu0 0
    %480 = vmatpush2.bf16.xpose.msra.mxu0 0
    %481 = vmatprep.subr.bf16.mxu0 0
    %482 = vmatpush2.bf16.xpose.msra.mxu0 0
    %483 = vmatprep.subr.bf16.mxu0 0
    %484 = vmatpush2.bf16.xpose.msra.mxu0 0
    %485 = vmatprep.subr.bf16.mxu0 0
    %486 = vmatpush2.bf16.xpose.msra.mxu0 0
    %487 = vmatprep.subr.bf16.mxu0 0
    %488 = vmatpush2.bf16.xpose.msra.mxu0 0
    %489 = vmatprep.subr.bf16.mxu0 0
    %490 = vmatpush2.bf16.xpose.msra.mxu0 0
    %491 = vmatprep.subr.bf16.mxu0 0
    %492 = vmatpush2.bf16.xpose.msra.mxu0 0
    %493 = vmatprep.mubr.bf16.mxu0 0
    %494 = vmatmul.mubr.bf16.gmra.mxu0 %v456
    %v495 = vpop.f32.mrf.mxu0
    %v496 = vadd.f32 0.0, %v495
    %v497 = vpop.f32.mrf.mxu0
    %v498 = vpop.f32.mrf.mxu0
    %v499 = vpop.f32.mrf.mxu0
    %500 = vdwg.mxu0
    %502 = vrot.lane.b32.xlu0 %v156, 112
    %v503 = vpop.permute.xlu0 %502
    %v505 = vsel %vm160, %v503, 0
    %v508 = vsel %vm160, %v156, 0
    %510 = vmatprep.subr.bf16.mxu0 0
    %511 = vmatpush1.bf16.xpose.msra.mxu0 0
    %512 = vmatprep.subr.bf16.mxu0 0
    %513 = vmatpush1.bf16.xpose.msra.mxu0 0
    %514 = vmatprep.subr.bf16.mxu0 0
    %515 = vmatpush1.bf16.xpose.msra.mxu0 0
    %516 = vmatprep.subr.bf16.mxu0 0
    %517 = vmatpush1.bf16.xpose.msra.mxu0 0
    %518 = vmatprep.subr.bf16.mxu0 0
    %519 = vmatpush1.bf16.xpose.msra.mxu0 0
    %520 = vmatprep.subr.bf16.mxu0 0
    %521 = vmatpush1.bf16.xpose.msra.mxu0 0
    %522 = vmatprep.subr.bf16.mxu0 0
    %523 = vmatpush1.bf16.xpose.msra.mxu0 0
    %524 = vmatprep.subr.bf16.mxu0 0
    %525 = vmatpush1.bf16.xpose.msra.mxu0 %v508
    %526 = vmatprep.subr.bf16.mxu0 0
    %527 = vmatpush2.bf16.xpose.msra.mxu0 0
    %528 = vmatprep.subr.bf16.mxu0 0
    %529 = vmatpush2.bf16.xpose.msra.mxu0 0
    %530 = vmatprep.subr.bf16.mxu0 0
    %531 = vmatpush2.bf16.xpose.msra.mxu0 0
    %532 = vmatprep.subr.bf16.mxu0 0
    %533 = vmatpush2.bf16.xpose.msra.mxu0 0
    %534 = vmatprep.subr.bf16.mxu0 0
    %535 = vmatpush2.bf16.xpose.msra.mxu0 0
    %536 = vmatprep.subr.bf16.mxu0 0
    %537 = vmatpush2.bf16.xpose.msra.mxu0 0
    %538 = vmatprep.subr.bf16.mxu0 0
    %539 = vmatpush2.bf16.xpose.msra.mxu0 0
    %540 = vmatprep.subr.bf16.mxu0 0
    %541 = vmatpush2.bf16.xpose.msra.mxu0 0
    %542 = vmatprep.mubr.bf16.mxu0 0
    %543 = vmatmul.mubr.bf16.gmra.mxu0 %v505
    %v544 = vpop.f32.mrf.mxu0
    %v545 = vadd.f32 0.0, %v544
    %v546 = vpop.f32.mrf.mxu0
    %v547 = vpop.f32.mrf.mxu0
    %v548 = vpop.f32.mrf.mxu0
    %549 = vdwg.mxu0
    %v550 = vlaneseq
    %v551 = vshrl.u32 %v550, 7
    %v552 = vlaneseq
    %v553 = vand.u32 %v552, 127
    %vm554 = vcmp.le.s32.totalorder %v553, %v551
    %v555 = vsel %vm554, 1, 0
    %vm556 = vcmp.eq.s32.totalorder %v555, 1
    %v557 = vsel %vm556, %v202, -1e+30
    %v558 = vsel %vm556, %v251, -1e+30
    %v559 = vsel %vm556, %v300, -1e+30
    %v560 = vsel %vm556, %v349, -1e+30
    %v561 = vsel %vm556, %v398, -1e+30
    %v562 = vsel %vm556, %v447, -1e+30
    %v563 = vsel %vm556, %v496, -1e+30
    %v564 = vsel %vm556, %v545, -1e+30
    %vm565 = vcmask 64512
    %v566 = vsel %vm565, %v557, -inf
    %567 = vmax.xlane.f32.xlu0 %v566
    %v568 = vpop.xlane.xlu0 %567
    %v569 = vsel %vm565, %v558, -inf
    %570 = vmax.xlane.f32.xlu0 %v569
    %v571 = vpop.xlane.xlu0 %570
    %v572 = vsel %vm565, %v559, -inf
    %573 = vmax.xlane.f32.xlu0 %v572
    %v574 = vpop.xlane.xlu0 %573
    %v575 = vsel %vm565, %v560, -inf
    %576 = vmax.xlane.f32.xlu0 %v575
    %v577 = vpop.xlane.xlu0 %576
    %v578 = vsel %vm565, %v561, -inf
    %579 = vmax.xlane.f32.xlu0 %v578
    %v580 = vpop.xlane.xlu0 %579
    %v581 = vsel %vm565, %v562, -inf
    %582 = vmax.xlane.f32.xlu0 %v581
    %v583 = vpop.xlane.xlu0 %582
    %v584 = vsel %vm565, %v563, -inf
    %585 = vmax.xlane.f32.xlu0 %v584
    %v586 = vpop.xlane.xlu0 %585
    %v587 = vsel %vm565, %v564, -inf
    %588 = vmax.xlane.f32.xlu0 %v587
    %v589 = vpop.xlane.xlu0 %588
    %v590 = vsub.f32 %v557, %v568
    %v591 = vsub.f32 %v558, %v571
    %v592 = vsub.f32 %v559, %v574
    %v593 = vsub.f32 %v560, %v577
    %v594 = vsub.f32 %v561, %v580
    %v595 = vsub.f32 %v562, %v583
    %v596 = vsub.f32 %v563, %v586
    %v597 = vsub.f32 %v564, %v589
    %v598 = vmul.f32 %v590, 1.442695
    %v599 = vpow.pop %v598
    %v600 = vmul.f32 %v591, 1.442695
    %v601 = vpow.pop %v600
    %v602 = vmul.f32 %v592, 1.442695
    %v603 = vpow.pop %v602
    %v604 = vmul.f32 %v593, 1.442695
    %v605 = vpow.pop %v604
    %v606 = vmul.f32 %v594, 1.442695
    %v607 = vpow.pop %v606
    %v608 = vmul.f32 %v595, 1.442695
    %v609 = vpow.pop %v608
    %v610 = vmul.f32 %v596, 1.442695
    %v611 = vpow.pop %v610
    %v612 = vmul.f32 %v597, 1.442695
    %v613 = vpow.pop %v612
    %v614 = vsel %vm565, %v599, 0.0
    %615 = vadd.xlane.f32.xlu0 %v614
    %v616 = vpop.xlane.xlu0 %615
    %v617 = vsel %vm565, %v601, 0.0
    %618 = vadd.xlane.f32.xlu0 %v617
    %v619 = vpop.xlane.xlu0 %618
    %v620 = vsel %vm565, %v603, 0.0
    %621 = vadd.xlane.f32.xlu0 %v620
    %v622 = vpop.xlane.xlu0 %621
    %v623 = vsel %vm565, %v605, 0.0
    %624 = vadd.xlane.f32.xlu0 %v623
    %v625 = vpop.xlane.xlu0 %624
    %v626 = vsel %vm565, %v607, 0.0
    %627 = vadd.xlane.f32.xlu0 %v626
    %v628 = vpop.xlane.xlu0 %627
    %v629 = vsel %vm565, %v609, 0.0
    %630 = vadd.xlane.f32.xlu0 %v629
    %v631 = vpop.xlane.xlu0 %630
    %v632 = vsel %vm565, %v611, 0.0
    %633 = vadd.xlane.f32.xlu0 %v632
    %v634 = vpop.xlane.xlu0 %633
    %v635 = vsel %vm565, %v613, 0.0
    %636 = vadd.xlane.f32.xlu0 %v635
    %v637 = vpop.xlane.xlu0 %636
    %v638 = vrcp.pop %v616
    %v639 = vrcp.pop %v619
    %v640 = vrcp.pop %v622
    %v641 = vrcp.pop %v625
    %v642 = vrcp.pop %v628
    %v643 = vrcp.pop %v631
    %v644 = vrcp.pop %v634
    %v645 = vrcp.pop %v637
    %v646 = vmul.f32 %v599, %v638
    %v647 = vmul.f32 %v601, %v639
    %v648 = vmul.f32 %v603, %v640
    %v649 = vmul.f32 %v605, %v641
    %v650 = vmul.f32 %v607, %v642
    %v651 = vmul.f32 %v609, %v643
    %v652 = vmul.f32 %v611, %v644
    %v653 = vmul.f32 %v613, %v645
    %v654 = vpack.c.bf16 %v646, %v646
    %v655 = vpack.c.bf16 %v647, %v647
    %v656 = vpack.c.bf16 %v648, %v648
    %v657 = vpack.c.bf16 %v649, %v649
    %v658 = vpack.c.bf16 %v650, %v650
    %v659 = vpack.c.bf16 %v651, %v651
    %v660 = vpack.c.bf16 %v652, %v652
    %v661 = vpack.c.bf16 %v653, %v653
    %662 = vrot.lane.b32.xlu0 %v149, 96
    %v663 = vpop.permute.xlu0 %662
    %v665 = vsel %vm565, %v654, 0
    %vm667 = vcmask 1043456
    %v669 = vsel %vm667, %v663, 0
    %671 = vmatprep.subr.bf16.mxu0 0
    %672 = vmatpush1.bf16.msra.mxu0 0
    %673 = vmatprep.subr.bf16.mxu0 0
    %674 = vmatpush1.bf16.msra.mxu0 0
    %675 = vmatprep.subr.bf16.mxu0 0
    %676 = vmatpush1.bf16.msra.mxu0 0
    %677 = vmatprep.subr.bf16.mxu0 0
    %678 = vmatpush1.bf16.msra.mxu0 0
    %679 = vmatprep.subr.bf16.mxu0 0
    %680 = vmatpush1.bf16.msra.mxu0 0
    %681 = vmatprep.subr.bf16.mxu0 0
    %682 = vmatpush1.bf16.msra.mxu0 0
    %683 = vmatprep.subr.bf16.mxu0 0
    %684 = vmatpush1.bf16.msra.mxu0 0
    %685 = vmatprep.subr.bf16.mxu0 0
    %686 = vmatpush1.bf16.msra.mxu0 %v669
    %687 = vmatprep.subr.bf16.mxu0 0
    %688 = vmatpush2.bf16.msra.mxu0 0
    %689 = vmatprep.subr.bf16.mxu0 0
    %690 = vmatpush2.bf16.msra.mxu0 0
    %691 = vmatprep.subr.bf16.mxu0 0
    %692 = vmatpush2.bf16.msra.mxu0 0
    %693 = vmatprep.subr.bf16.mxu0 0
    %694 = vmatpush2.bf16.msra.mxu0 0
    %695 = vmatprep.subr.bf16.mxu0 0
    %696 = vmatpush2.bf16.msra.mxu0 0
    %697 = vmatprep.subr.bf16.mxu0 0
    %698 = vmatpush2.bf16.msra.mxu0 0
    %699 = vmatprep.subr.bf16.mxu0 0
    %700 = vmatpush2.bf16.msra.mxu0 0
    %701 = vmatprep.subr.bf16.mxu0 0
    %702 = vmatpush2.bf16.msra.mxu0 0
    %703 = vmatprep.mubr.bf16.mxu0 0
    %704 = vmatmul.mubr.bf16.gmra.mxu0 %v665
    %v705 = vpop.f32.mrf.mxu0
    %v706 = vadd.f32 0.0, %v705
    %v707 = vpop.f32.mrf.mxu0
    %v708 = vpop.f32.mrf.mxu0
    %v709 = vpop.f32.mrf.mxu0
    %710 = vdwg.mxu0
    %711 = vrot.lane.b32.xlu0 %v150, 96
    %v712 = vpop.permute.xlu0 %711
    %v714 = vsel %vm565, %v655, 0
    %v717 = vsel %vm667, %v712, 0
    %719 = vmatprep.subr.bf16.mxu0 0
    %720 = vmatpush1.bf16.msra.mxu0 0
    %721 = vmatprep.subr.bf16.mxu0 0
    %722 = vmatpush1.bf16.msra.mxu0 0
    %723 = vmatprep.subr.bf16.mxu0 0
    %724 = vmatpush1.bf16.msra.mxu0 0
    %725 = vmatprep.subr.bf16.mxu0 0
    %726 = vmatpush1.bf16.msra.mxu0 0
    %727 = vmatprep.subr.bf16.mxu0 0
    %728 = vmatpush1.bf16.msra.mxu0 0
    %729 = vmatprep.subr.bf16.mxu0 0
    %730 = vmatpush1.bf16.msra.mxu0 0
    %731 = vmatprep.subr.bf16.mxu0 0
    %732 = vmatpush1.bf16.msra.mxu0 0
    %733 = vmatprep.subr.bf16.mxu0 0
    %734 = vmatpush1.bf16.msra.mxu0 %v717
    %735 = vmatprep.subr.bf16.mxu0 0
    %736 = vmatpush2.bf16.msra.mxu0 0
    %737 = vmatprep.subr.bf16.mxu0 0
    %738 = vmatpush2.bf16.msra.mxu0 0
    %739 = vmatprep.subr.bf16.mxu0 0
    %740 = vmatpush2.bf16.msra.mxu0 0
    %741 = vmatprep.subr.bf16.mxu0 0
    %742 = vmatpush2.bf16.msra.mxu0 0
    %743 = vmatprep.subr.bf16.mxu0 0
    %744 = vmatpush2.bf16.msra.mxu0 0
    %745 = vmatprep.subr.bf16.mxu0 0
    %746 = vmatpush2.bf16.msra.mxu0 0
    %747 = vmatprep.subr.bf16.mxu0 0
    %748 = vmatpush2.bf16.msra.mxu0 0
    %749 = vmatprep.subr.bf16.mxu0 0
    %750 = vmatpush2.bf16.msra.mxu0 0
    %751 = vmatprep.mubr.bf16.mxu0 0
    %752 = vmatmul.mubr.bf16.gmra.mxu0 %v714
    %v753 = vpop.f32.mrf.mxu0
    %v754 = vadd.f32 0.0, %v753
    %v755 = vpop.f32.mrf.mxu0
    %v756 = vpop.f32.mrf.mxu0
    %v757 = vpop.f32.mrf.mxu0
    %758 = vdwg.mxu0
    %759 = vrot.lane.b32.xlu0 %v151, 96
    %v760 = vpop.permute.xlu0 %759
    %v762 = vsel %vm565, %v656, 0
    %v765 = vsel %vm667, %v760, 0
    %767 = vmatprep.subr.bf16.mxu0 0
    %768 = vmatpush1.bf16.msra.mxu0 0
    %769 = vmatprep.subr.bf16.mxu0 0
    %770 = vmatpush1.bf16.msra.mxu0 0
    %771 = vmatprep.subr.bf16.mxu0 0
    %772 = vmatpush1.bf16.msra.mxu0 0
    %773 = vmatprep.subr.bf16.mxu0 0
    %774 = vmatpush1.bf16.msra.mxu0 0
    %775 = vmatprep.subr.bf16.mxu0 0
    %776 = vmatpush1.bf16.msra.mxu0 0
    %777 = vmatprep.subr.bf16.mxu0 0
    %778 = vmatpush1.bf16.msra.mxu0 0
    %779 = vmatprep.subr.bf16.mxu0 0
    %780 = vmatpush1.bf16.msra.mxu0 0
    %781 = vmatprep.subr.bf16.mxu0 0
    %782 = vmatpush1.bf16.msra.mxu0 %v765
    %783 = vmatprep.subr.bf16.mxu0 0
    %784 = vmatpush2.bf16.msra.mxu0 0
    %785 = vmatprep.subr.bf16.mxu0 0
    %786 = vmatpush2.bf16.msra.mxu0 0
    %787 = vmatprep.subr.bf16.mxu0 0
    %788 = vmatpush2.bf16.msra.mxu0 0
    %789 = vmatprep.subr.bf16.mxu0 0
    %790 = vmatpush2.bf16.msra.mxu0 0
    %791 = vmatprep.subr.bf16.mxu0 0
    %792 = vmatpush2.bf16.msra.mxu0 0
    %793 = vmatprep.subr.bf16.mxu0 0
    %794 = vmatpush2.bf16.msra.mxu0 0
    %795 = vmatprep.subr.bf16.mxu0 0
    %796 = vmatpush2.bf16.msra.mxu0 0
    %797 = vmatprep.subr.bf16.mxu0 0
    %798 = vmatpush2.bf16.msra.mxu0 0
    %799 = vmatprep.mubr.bf16.mxu0 0
    %800 = vmatmul.mubr.bf16.gmra.mxu0 %v762
    %v801 = vpop.f32.mrf.mxu0
    %v802 = vadd.f32 0.0, %v801
    %v803 = vpop.f32.mrf.mxu0
    %v804 = vpop.f32.mrf.mxu0
    %v805 = vpop.f32.mrf.mxu0
    %806 = vdwg.mxu0
    %807 = vrot.lane.b32.xlu0 %v152, 96
    %v808 = vpop.permute.xlu0 %807
    %v810 = vsel %vm565, %v657, 0
    %v813 = vsel %vm667, %v808, 0
    %815 = vmatprep.subr.bf16.mxu0 0
    %816 = vmatpush1.bf16.msra.mxu0 0
    %817 = vmatprep.subr.bf16.mxu0 0
    %818 = vmatpush1.bf16.msra.mxu0 0
    %819 = vmatprep.subr.bf16.mxu0 0
    %820 = vmatpush1.bf16.msra.mxu0 0
    %821 = vmatprep.subr.bf16.mxu0 0
    %822 = vmatpush1.bf16.msra.mxu0 0
    %823 = vmatprep.subr.bf16.mxu0 0
    %824 = vmatpush1.bf16.msra.mxu0 0
    %825 = vmatprep.subr.bf16.mxu0 0
    %826 = vmatpush1.bf16.msra.mxu0 0
    %827 = vmatprep.subr.bf16.mxu0 0
    %828 = vmatpush1.bf16.msra.mxu0 0
    %829 = vmatprep.subr.bf16.mxu0 0
    %830 = vmatpush1.bf16.msra.mxu0 %v813
    %831 = vmatprep.subr.bf16.mxu0 0
    %832 = vmatpush2.bf16.msra.mxu0 0
    %833 = vmatprep.subr.bf16.mxu0 0
    %834 = vmatpush2.bf16.msra.mxu0 0
    %835 = vmatprep.subr.bf16.mxu0 0
    %836 = vmatpush2.bf16.msra.mxu0 0
    %837 = vmatprep.subr.bf16.mxu0 0
    %838 = vmatpush2.bf16.msra.mxu0 0
    %839 = vmatprep.subr.bf16.mxu0 0
    %840 = vmatpush2.bf16.msra.mxu0 0
    %841 = vmatprep.subr.bf16.mxu0 0
    %842 = vmatpush2.bf16.msra.mxu0 0
    %843 = vmatprep.subr.bf16.mxu0 0
    %844 = vmatpush2.bf16.msra.mxu0 0
    %845 = vmatprep.subr.bf16.mxu0 0
    %846 = vmatpush2.bf16.msra.mxu0 0
    %847 = vmatprep.mubr.bf16.mxu0 0
    %848 = vmatmul.mubr.bf16.gmra.mxu0 %v810
    %v849 = vpop.f32.mrf.mxu0
    %v850 = vadd.f32 0.0, %v849
    %v851 = vpop.f32.mrf.mxu0
    %v852 = vpop.f32.mrf.mxu0
    %v853 = vpop.f32.mrf.mxu0
    %854 = vdwg.mxu0
    %855 = vrot.lane.b32.xlu0 %v153, 96
    %v856 = vpop.permute.xlu0 %855
    %v858 = vsel %vm565, %v658, 0
    %v861 = vsel %vm667, %v856, 0
    %863 = vmatprep.subr.bf16.mxu0 0
    %864 = vmatpush1.bf16.msra.mxu0 0
    %865 = vmatprep.subr.bf16.mxu0 0
    %866 = vmatpush1.bf16.msra.mxu0 0
    %867 = vmatprep.subr.bf16.mxu0 0
    %868 = vmatpush1.bf16.msra.mxu0 0
    %869 = vmatprep.subr.bf16.mxu0 0
    %870 = vmatpush1.bf16.msra.mxu0 0
    %871 = vmatprep.subr.bf16.mxu0 0
    %872 = vmatpush1.bf16.msra.mxu0 0
    %873 = vmatprep.subr.bf16.mxu0 0
    %874 = vmatpush1.bf16.msra.mxu0 0
    %875 = vmatprep.subr.bf16.mxu0 0
    %876 = vmatpush1.bf16.msra.mxu0 0
    %877 = vmatprep.subr.bf16.mxu0 0
    %878 = vmatpush1.bf16.msra.mxu0 %v861
    %879 = vmatprep.subr.bf16.mxu0 0
    %880 = vmatpush2.bf16.msra.mxu0 0
    %881 = vmatprep.subr.bf16.mxu0 0
    %882 = vmatpush2.bf16.msra.mxu0 0
    %883 = vmatprep.subr.bf16.mxu0 0
    %884 = vmatpush2.bf16.msra.mxu0 0
    %885 = vmatprep.subr.bf16.mxu0 0
    %886 = vmatpush2.bf16.msra.mxu0 0
    %887 = vmatprep.subr.bf16.mxu0 0
    %888 = vmatpush2.bf16.msra.mxu0 0
    %889 = vmatprep.subr.bf16.mxu0 0
    %890 = vmatpush2.bf16.msra.mxu0 0
    %891 = vmatprep.subr.bf16.mxu0 0
    %892 = vmatpush2.bf16.msra.mxu0 0
    %893 = vmatprep.subr.bf16.mxu0 0
    %894 = vmatpush2.bf16.msra.mxu0 0
    %895 = vmatprep.mubr.bf16.mxu0 0
    %896 = vmatmul.mubr.bf16.gmra.mxu0 %v858
    %v897 = vpop.f32.mrf.mxu0
    %v898 = vadd.f32 0.0, %v897
    %v899 = vpop.f32.mrf.mxu0
    %v900 = vpop.f32.mrf.mxu0
    %v901 = vpop.f32.mrf.mxu0
    %902 = vdwg.mxu0
    %903 = vrot.lane.b32.xlu0 %v154, 96
    %v904 = vpop.permute.xlu0 %903
    %v906 = vsel %vm565, %v659, 0
    %v909 = vsel %vm667, %v904, 0
    %911 = vmatprep.subr.bf16.mxu0 0
    %912 = vmatpush1.bf16.msra.mxu0 0
    %913 = vmatprep.subr.bf16.mxu0 0
    %914 = vmatpush1.bf16.msra.mxu0 0
    %915 = vmatprep.subr.bf16.mxu0 0
    %916 = vmatpush1.bf16.msra.mxu0 0
    %917 = vmatprep.subr.bf16.mxu0 0
    %918 = vmatpush1.bf16.msra.mxu0 0
    %919 = vmatprep.subr.bf16.mxu0 0
    %920 = vmatpush1.bf16.msra.mxu0 0
    %921 = vmatprep.subr.bf16.mxu0 0
    %922 = vmatpush1.bf16.msra.mxu0 0
    %923 = vmatprep.subr.bf16.mxu0 0
    %924 = vmatpush1.bf16.msra.mxu0 0
    %925 = vmatprep.subr.bf16.mxu0 0
    %926 = vmatpush1.bf16.msra.mxu0 %v909
    %927 = vmatprep.subr.bf16.mxu0 0
    %928 = vmatpush2.bf16.msra.mxu0 0
    %929 = vmatprep.subr.bf16.mxu0 0
    %930 = vmatpush2.bf16.msra.mxu0 0
    %931 = vmatprep.subr.bf16.mxu0 0
    %932 = vmatpush2.bf16.msra.mxu0 0
    %933 = vmatprep.subr.bf16.mxu0 0
    %934 = vmatpush2.bf16.msra.mxu0 0
    %935 = vmatprep.subr.bf16.mxu0 0
    %936 = vmatpush2.bf16.msra.mxu0 0
    %937 = vmatprep.subr.bf16.mxu0 0
    %938 = vmatpush2.bf16.msra.mxu0 0
    %939 = vmatprep.subr.bf16.mxu0 0
    %940 = vmatpush2.bf16.msra.mxu0 0
    %941 = vmatprep.subr.bf16.mxu0 0
    %942 = vmatpush2.bf16.msra.mxu0 0
    %943 = vmatprep.mubr.bf16.mxu0 0
    %944 = vmatmul.mubr.bf16.gmra.mxu0 %v906
    %v945 = vpop.f32.mrf.mxu0
    %v946 = vadd.f32 0.0, %v945
    %v947 = vpop.f32.mrf.mxu0
    %v948 = vpop.f32.mrf.mxu0
    %v949 = vpop.f32.mrf.mxu0
    %950 = vdwg.mxu0
    %951 = vrot.lane.b32.xlu0 %v155, 96
    %v952 = vpop.permute.xlu0 %951
    %v954 = vsel %vm565, %v660, 0
    %v957 = vsel %vm667, %v952, 0
    %959 = vmatprep.subr.bf16.mxu0 0
    %960 = vmatpush1.bf16.msra.mxu0 0
    %961 = vmatprep.subr.bf16.mxu0 0
    %962 = vmatpush1.bf16.msra.mxu0 0
    %963 = vmatprep.subr.bf16.mxu0 0
    %964 = vmatpush1.bf16.msra.mxu0 0
    %965 = vmatprep.subr.bf16.mxu0 0
    %966 = vmatpush1.bf16.msra.mxu0 0
    %967 = vmatprep.subr.bf16.mxu0 0
    %968 = vmatpush1.bf16.msra.mxu0 0
    %969 = vmatprep.subr.bf16.mxu0 0
    %970 = vmatpush1.bf16.msra.mxu0 0
    %971 = vmatprep.subr.bf16.mxu0 0
    %972 = vmatpush1.bf16.msra.mxu0 0
    %973 = vmatprep.subr.bf16.mxu0 0
    %974 = vmatpush1.bf16.msra.mxu0 %v957
    %975 = vmatprep.subr.bf16.mxu0 0
    %976 = vmatpush2.bf16.msra.mxu0 0
    %977 = vmatprep.subr.bf16.mxu0 0
    %978 = vmatpush2.bf16.msra.mxu0 0
    %979 = vmatprep.subr.bf16.mxu0 0
    %980 = vmatpush2.bf16.msra.mxu0 0
    %981 = vmatprep.subr.bf16.mxu0 0
    %982 = vmatpush2.bf16.msra.mxu0 0
    %983 = vmatprep.subr.bf16.mxu0 0
    %984 = vmatpush2.bf16.msra.mxu0 0
    %985 = vmatprep.subr.bf16.mxu0 0
    %986 = vmatpush2.bf16.msra.mxu0 0
    %987 = vmatprep.subr.bf16.mxu0 0
    %988 = vmatpush2.bf16.msra.mxu0 0
    %989 = vmatprep.subr.bf16.mxu0 0
    %990 = vmatpush2.bf16.msra.mxu0 0
    %991 = vmatprep.mubr.bf16.mxu0 0
    %992 = vmatmul.mubr.bf16.gmra.mxu0 %v954
    %v993 = vpop.f32.mrf.mxu0
    %v994 = vadd.f32 0.0, %v993
    %v995 = vpop.f32.mrf.mxu0
    %v996 = vpop.f32.mrf.mxu0
    %v997 = vpop.f32.mrf.mxu0
    %998 = vdwg.mxu0
    %999 = vrot.lane.b32.xlu0 %v156, 96
    %v1000 = vpop.permute.xlu0 %999
    %v1002 = vsel %vm565, %v661, 0
    %v1005 = vsel %vm667, %v1000, 0
    %1007 = vmatprep.subr.bf16.mxu0 0
    %1008 = vmatpush1.bf16.msra.mxu0 0
    %1009 = vmatprep.subr.bf16.mxu0 0
    %1010 = vmatpush1.bf16.msra.mxu0 0
    %1011 = vmatprep.subr.bf16.mxu0 0
    %1012 = vmatpush1.bf16.msra.mxu0 0
    %1013 = vmatprep.subr.bf16.mxu0 0
    %1014 = vmatpush1.bf16.msra.mxu0 0
    %1015 = vmatprep.subr.bf16.mxu0 0
    %1016 = vmatpush1.bf16.msra.mxu0 0
    %1017 = vmatprep.subr.bf16.mxu0 0
    %1018 = vmatpush1.bf16.msra.mxu0 0
    %1019 = vmatprep.subr.bf16.mxu0 0
    %1020 = vmatpush1.bf16.msra.mxu0 0
    %1021 = vmatprep.subr.bf16.mxu0 0
    %1022 = vmatpush1.bf16.msra.mxu0 %v1005
    %1023 = vmatprep.subr.bf16.mxu0 0
    %1024 = vmatpush2.bf16.msra.mxu0 0
    %1025 = vmatprep.subr.bf16.mxu0 0
    %1026 = vmatpush2.bf16.msra.mxu0 0
    %1027 = vmatprep.subr.bf16.mxu0 0
    %1028 = vmatpush2.bf16.msra.mxu0 0
    %1029 = vmatprep.subr.bf16.mxu0 0
    %1030 = vmatpush2.bf16.msra.mxu0 0
    %1031 = vmatprep.subr.bf16.mxu0 0
    %1032 = vmatpush2.bf16.msra.mxu0 0
    %1033 = vmatprep.subr.bf16.mxu0 0
    %1034 = vmatpush2.bf16.msra.mxu0 0
    %1035 = vmatprep.subr.bf16.mxu0 0
    %1036 = vmatpush2.bf16.msra.mxu0 0
    %1037 = vmatprep.subr.bf16.mxu0 0
    %1038 = vmatpush2.bf16.msra.mxu0 0
    %1039 = vmatprep.mubr.bf16.mxu0 0
    %1040 = vmatmul.mubr.bf16.gmra.mxu0 %v1002
    %v1041 = vpop.f32.mrf.mxu0
    %v1042 = vadd.f32 0.0, %v1041
    %v1043 = vpop.f32.mrf.mxu0
    %v1044 = vpop.f32.mrf.mxu0
    %v1045 = vpop.f32.mrf.mxu0
    %1046 = vdwg.mxu0
    %v1047 = vcombine.low %v706, %v802
    %v1048 = vcombine.high %v706, %v802
    %v1050 = vunpack.c.l.s4 1983009808
    %v1051 = vunpack.c.0.s8 %v1050
    %v1052 = vlaneseq
    %v1053 = vshrl.u32 %v1052, 7
    %v1054 = vsub.s32 %v1051, %v1053
    %v1055 = vrot.slane %v1047, %v1054
    %v1057 = vunpack.c.l.s4 1983009808
    %v1058 = vunpack.c.0.s8 %v1057
    %v1059 = vlaneseq
    %v1060 = vshrl.u32 %v1059, 7
    %v1061 = vsub.s32 %v1058, %v1060
    %v1062 = vrot.slane %v1048, %v1061
    %v1063 = vcombine.low %v754, %v850
    %v1064 = vcombine.high %v754, %v850
    %v1066 = vunpack.c.l.s4 1983009808
    %v1067 = vunpack.c.0.s8 %v1066
    %v1068 = vlaneseq
    %v1069 = vshrl.u32 %v1068, 7
    %v1070 = vsub.s32 %v1067, %v1069
    %v1071 = vrot.slane %v1063, %v1070
    %v1073 = vunpack.c.l.s4 1983009808
    %v1074 = vunpack.c.0.s8 %v1073
    %v1075 = vlaneseq
    %v1076 = vshrl.u32 %v1075, 7
    %v1077 = vsub.s32 %v1074, %v1076
    %v1078 = vrot.slane %v1064, %v1077
    %v1079 = vcombine.low %v898, %v994
    %v1080 = vcombine.high %v898, %v994
    %v1082 = vunpack.c.l.s4 1983009808
    %v1083 = vunpack.c.0.s8 %v1082
    %v1084 = vlaneseq
    %v1085 = vshrl.u32 %v1084, 7
    %v1086 = vsub.s32 %v1083, %v1085
    %v1087 = vrot.slane %v1079, %v1086
    %v1089 = vunpack.c.l.s4 1983009808
    %v1090 = vunpack.c.0.s8 %v1089
    %v1091 = vlaneseq
    %v1092 = vshrl.u32 %v1091, 7
    %v1093 = vsub.s32 %v1090, %v1092
    %v1094 = vrot.slane %v1080, %v1093
    %v1095 = vcombine.low %v946, %v1042
    %v1096 = vcombine.high %v946, %v1042
    %v1098 = vunpack.c.l.s4 1983009808
    %v1099 = vunpack.c.0.s8 %v1098
    %v1100 = vlaneseq
    %v1101 = vshrl.u32 %v1100, 7
    %v1102 = vsub.s32 %v1099, %v1101
    %v1103 = vrot.slane %v1095, %v1102
    %v1105 = vunpack.c.l.s4 1983009808
    %v1106 = vunpack.c.0.s8 %v1105
    %v1107 = vlaneseq
    %v1108 = vshrl.u32 %v1107, 7
    %v1109 = vsub.s32 %v1106, %v1108
    %v1110 = vrot.slane %v1096, %v1109
    %v1111 = vcombine.low %v1055, %v1071
    %v1112 = vcombine.high %v1055, %v1071
    %v1114 = vunpack.c.l.s4 1934713408
    %v1115 = vunpack.c.0.s8 %v1114
    %v1116 = vlaneseq
    %v1117 = vshrl.u32 %v1116, 7
    %v1118 = vsub.s32 %v1115, %v1117
    %v1119 = vrot.slane %v1111, %v1118
    %v1121 = vunpack.c.l.s4 1934713408
    %v1122 = vunpack.c.0.s8 %v1121
    %v1123 = vlaneseq
    %v1124 = vshrl.u32 %v1123, 7
    %v1125 = vsub.s32 %v1122, %v1124
    %v1126 = vrot.slane %v1112, %v1125
    %v1127 = vcombine.low %v1062, %v1078
    %v1128 = vcombine.high %v1062, %v1078
    %v1130 = vunpack.c.l.s4 1934713408
    %v1131 = vunpack.c.0.s8 %v1130
    %v1132 = vlaneseq
    %v1133 = vshrl.u32 %v1132, 7
    %v1134 = vsub.s32 %v1131, %v1133
    %v1135 = vrot.slane %v1127, %v1134
    %v1137 = vunpack.c.l.s4 1934713408
    %v1138 = vunpack.c.0.s8 %v1137
    %v1139 = vlaneseq
    %v1140 = vshrl.u32 %v1139, 7
    %v1141 = vsub.s32 %v1138, %v1140
    %v1142 = vrot.slane %v1128, %v1141
    %v1143 = vcombine.low %v1087, %v1103
    %v1144 = vcombine.high %v1087, %v1103
    %v1146 = vunpack.c.l.s4 1934713408
    %v1147 = vunpack.c.0.s8 %v1146
    %v1148 = vlaneseq
    %v1149 = vshrl.u32 %v1148, 7
    %v1150 = vsub.s32 %v1147, %v1149
    %v1151 = vrot.slane %v1143, %v1150
    %v1153 = vunpack.c.l.s4 1934713408
    %v1154 = vunpack.c.0.s8 %v1153
    %v1155 = vlaneseq
    %v1156 = vshrl.u32 %v1155, 7
    %v1157 = vsub.s32 %v1154, %v1156
    %v1158 = vrot.slane %v1144, %v1157
    %v1159 = vcombine.low %v1094, %v1110
    %v1160 = vcombine.high %v1094, %v1110
    %v1162 = vunpack.c.l.s4 1934713408
    %v1163 = vunpack.c.0.s8 %v1162
    %v1164 = vlaneseq
    %v1165 = vshrl.u32 %v1164, 7
    %v1166 = vsub.s32 %v1163, %v1165
    %v1167 = vrot.slane %v1159, %v1166
    %v1169 = vunpack.c.l.s4 1934713408
    %v1170 = vunpack.c.0.s8 %v1169
    %v1171 = vlaneseq
    %v1172 = vshrl.u32 %v1171, 7
    %v1173 = vsub.s32 %v1170, %v1172
    %v1174 = vrot.slane %v1160, %v1173
    %v1175 = vcombine.low %v1119, %v1151
    %v1176 = vcombine.high %v1119, %v1151
    %v1177 = vcombine.low %v1126, %v1158
    %v1178 = vcombine.high %v1126, %v1158
    %v1179 = vcombine.low %v1135, %v1167
    %v1180 = vcombine.high %v1135, %v1167
    %v1181 = vcombine.low %v1142, %v1174
    %v1182 = vcombine.high %v1142, %v1174
    %1184 = vrot.lane.b32.xlu0 %v1176, 16
    %v1185 = vpop.permute.xlu0 %1184
    %1188 = vrot.lane.b32.xlu0 %v1177, 32
    %v1189 = vpop.permute.xlu0 %1188
    %1192 = vrot.lane.b32.xlu0 %v1178, 48
    %v1193 = vpop.permute.xlu0 %1192
    %1196 = vrot.lane.b32.xlu0 %v1179, 64
    %v1197 = vpop.permute.xlu0 %1196
    %1200 = vrot.lane.b32.xlu0 %v1180, 80
    %v1201 = vpop.permute.xlu0 %1200
    %1204 = vrot.lane.b32.xlu0 %v1181, 96
    %v1205 = vpop.permute.xlu0 %1204
    %1208 = vrot.lane.b32.xlu0 %v1182, 112
    %v1209 = vpop.permute.xlu0 %1208
    %v1211 = vsel %vm160, %v1175, %v1185
    %vm1212 = vcmask 261120
    %v1213 = vsel %vm1212, %v1211, %v1189
    %vm1214 = vcmask 392192
    %v1215 = vsel %vm1214, %v1213, %v1193
    %v1216 = vsel %vm71, %v1215, %v1197
    %vm1217 = vcmask 654336
    %v1218 = vsel %vm1217, %v1216, %v1201
    %vm1219 = vcmask 785408
    %v1220 = vsel %vm1219, %v1218, %v1205
    %vm1221 = vcmask 916480
    %v1222 = vsel %vm1221, %v1220, %v1209
    %1223 = vst [vmem:[#allocation5] sm:$0xff] %v1222
    // Predicated region
    $region14: #{tpu_custom_call.1} parent=1 // pred_check
      _
    $region15: #{tpu_custom_call.1} parent=1 // pred_check_branch
      %1225 = sbr.rel (0) target = $region17
    $region16: #{tpu_custom_call.1} parent=1 // pred_region
      %s1227 = ssub.s32 128, 128
      %1228 = vsyncadd [#allocation4], %s1227
      %s1230 = sshll.u32 [#allocation5], 4
      %s1231 = int_to_ptr.vmem [resolvable:$true] %s1230
      %1233 = dma.vmem_to_hbm [thread:$0]  %s1231, 128, %s2, [#allocation4]
    $region17: #{tpu_custom_call.1} parent=1 // pred_fallthru
      _
    // Predicated region
    $region18: #{tpu_custom_call.1} parent=1 // pred_check
      _
    $region19: #{tpu_custom_call.1} parent=1 // pred_check_branch
      %1235 = sbr.rel (0) target = $region21
    $region20: #{tpu_custom_call.1} parent=1 // pred_region
      %1236 = dma.done [#allocation4], 128
    $region21: #{tpu_custom_call.1} parent=1 // pred_fallthru
      _
    %1237 = vsyncpa [#allocation3], 1
    %1238 = vsyncpa [#allocation4], 1

</llo_original>
